<compile_context>
chip_gen: v7x
topology: tpu7x:2x2x1
jax: 0.10.0
libtpu: 0.0.40
codegen_flags: <defaults>
</compile_context>

<pallas_src>
import functools

import jax
import jax.numpy as jnp
from jax.experimental import pallas as pl
from jax.experimental.pallas import tpu as pltpu

_LANE = 128
_SUBLANE_BF16 = 16          # bf16 sublane packing: keep batch tiles % 16 == 0
_NEG_BIG = -1e30            # poison value for padded class lanes


def _round_up(x: int, m: int) -> int:
    return ((x + m - 1) // m) * m


def _vmem_limit_bytes() -> int:
    """Generation-aware VMEM limit: 75% of physical capacity, >= 16 MiB.
    Fallback (64 MiB) is safe on every generation incl. v7x."""
    try:
        cap = int(pltpu.get_tpu_info().vmem_capacity_bytes)
    except Exception:
        cap = 64 << 20
    return max(16 << 20, (cap * 3) // 4)


def _tb_cap_from_vmem(F: int, Cp: int, budget_bytes: int,
                      max_tb: int = 1024) -> int:
    """Largest batch tile (multiple of 16) fitting the VMEM budget.
    Weights are single-buffered; only per-batch-row streams double-buffer."""
    fixed = F * Cp * 2 + Cp * 4 + (2 << 20)        # bf16 w (x1) + f32 b (x1) + slack
    per_row = (2 * 2 * F                            # bf16 x tile, double-buffered
               + 2 * 4 * Cp                         # f32 scores tile, double-buffered
               + 4 * 4 * Cp                         # f32 elementwise temporaries
               + 4 * 4 * _LANE)                     # lane-padded (tb,1) y / nll tiles
    avail = max(budget_bytes - fixed, per_row * _SUBLANE_BF16)
    tb = (avail // per_row) // _SUBLANE_BF16 * _SUBLANE_BF16
    return int(max(_SUBLANE_BF16, min(max_tb, tb)))


def _choose_tb(B_pad: int, tb_cap: int, min_blocks: int = 2) -> int:
    """Pick tb: a multiple of 16 dividing B_pad, <= tb_cap, preferring
    >= min_blocks grid steps (v7x megacore sharding + DMA/compute overlap)."""
    cands = [c for c in range(_SUBLANE_BF16, B_pad + 1, _SUBLANE_BF16)
             if B_pad % c == 0]
    good = [c for c in cands if c <= tb_cap and B_pad // c >= min_blocks]
    if good:
        return max(good)
    ok = [c for c in cands if c <= tb_cap]
    if ok:
        return max(ok)
    return min(cands)


def _make_forward_kernel(num_valid_rows: int, padded_rows: int, tb: int):
    mask_rows = padded_rows > num_valid_rows

    def kernel(x_ref, w_ref, b_ref, y_ref, scores_ref, nll_ref):
        # Linear head on the MXU: bf16 inputs, f32 accumulate, f32 bias.
        scores = jnp.dot(x_ref[...], w_ref[...],
                         preferred_element_type=jnp.float32) + b_ref[...]
        scores_ref[...] = scores                      # lane-dense (Cp % 128 == 0)

        # Numerically stable LSE.  Padded class lanes carry a poisoned bias
        # (-1e30) so they drop out of max / exp without an in-kernel mask.
        m = jnp.max(scores, axis=-1, keepdims=True)             # (tb, 1)
        lse = m + jnp.log(jnp.sum(jnp.exp(scores - m), axis=-1,
                                  keepdims=True))               # (tb, 1)

        # Label gather via select + sum (labels < C, never hit padded lanes).
        labels = y_ref[...]                                      # (tb, 1) i32
        class_ids = jax.lax.broadcasted_iota(jnp.int32, scores.shape, 1)
        label_logit = jnp.sum(jnp.where(class_ids == labels, scores, 0.0),
                              axis=-1, keepdims=True)            # (tb, 1)

        nll = lse - label_logit                                  # (tb, 1)
        if mask_rows:
            row_ids = (pl.program_id(0) * tb
                       + jax.lax.broadcasted_iota(jnp.int32, (tb, 1), 0))
            nll = jnp.where(row_ids < num_valid_rows, nll, 0.0)
        nll_ref[...] = nll

    return kernel


@functools.partial(jax.jit, static_argnames=("tb",))
def module_forward(x, w, b, y, *, tb=None):
    """Concrete Module.forward: returns {'loss': scalar, 'scores': (B, C)}."""
    B, F = x.shape
    C = w.shape[1]

    # Lane-dense class dimension (multiple of 128).
    Cp = _round_up(max(C, _LANE), _LANE)
    # bf16 sublane-aligned batch (pads at most a 15-row ragged tail).
    B_pad = _round_up(B, _SUBLANE_BF16)

    vmem_limit = _vmem_limit_bytes()
    tb_cap = _tb_cap_from_vmem(F, Cp, vmem_limit - (4 << 20))
    if tb is None:
        tb = _choose_tb(B_pad, tb_cap)
    else:
        tb = max(_SUBLANE_BF16, _round_up(int(tb), _SUBLANE_BF16))
        B_pad = _round_up(B, tb)
    n_blocks = B_pad // tb

    # bf16 input streams (MXU-native everywhere, halves HBM traffic);
    # bias / LSE / loss stay f32.
    x_p = x.astype(jnp.bfloat16)
    if B_pad != B:
        x_p = jnp.pad(x_p, ((0, B_pad - B), (0, 0)))
    w_p = w.astype(jnp.bfloat16)
    if Cp != C:
        w_p = jnp.pad(w_p, ((0, 0), (0, Cp - C)))
    b_p = b.astype(jnp.float32).reshape(1, C)
    if Cp != C:
        # Poison padded class lanes once: they vanish from max/LSE in-kernel.
        b_p = jnp.pad(b_p, ((0, 0), (0, Cp - C)), constant_values=_NEG_BIG)
    y_p = y.astype(jnp.int32).reshape(B, 1)
    if B_pad != B:
        y_p = jnp.pad(y_p, ((0, B_pad - B), (0, 0)))

    kernel = _make_forward_kernel(B, B_pad, tb)

    cost = pl.CostEstimate(
        flops=2 * B_pad * F * Cp,
        transcendentals=B_pad * Cp,
        bytes_accessed=(2 * (B_pad * F + F * Cp)           # bf16 x, w
                        + 4 * (Cp + B_pad                   # f32 b, i32 y
                               + B_pad * Cp + B_pad)),      # f32 scores, nll
    )

    scores_pad, nll = pl.pallas_call(
        kernel,
        out_shape=(
            jax.ShapeDtypeStruct((B_pad, Cp), jnp.float32),
            jax.ShapeDtypeStruct((B_pad, 1), jnp.float32),
        ),
        grid_spec=pltpu.PrefetchScalarGridSpec(
            num_scalar_prefetch=0,
            grid=(n_blocks,),
            in_specs=[
                pl.BlockSpec((tb, F), lambda i: (i, 0)),          # x tile
                pl.BlockSpec((F, Cp), lambda i: (0, 0),
                             pipeline_mode=pl.Buffered(1)),       # w resident
                pl.BlockSpec((1, Cp), lambda i: (0, 0),
                             pipeline_mode=pl.Buffered(1)),       # b resident
                pl.BlockSpec((tb, 1), lambda i: (i, 0)),          # labels tile
            ],
            out_specs=[
                pl.BlockSpec((tb, Cp), lambda i: (i, 0)),         # scores tile
                pl.BlockSpec((tb, 1), lambda i: (i, 0)),          # per-row NLL
            ],
        ),
        compiler_params=pltpu.CompilerParams(
            dimension_semantics=("parallel",),
            vmem_limit_bytes=int(vmem_limit)),
        cost_estimate=cost,
    )(x_p, w_p, b_p, y_p)

    scores = scores_pad
    if Cp != C or B_pad != B:
        scores = scores[:B, :C]
    loss = jnp.sum(nll) / jnp.float32(B)   # global-batch mean
    return {"loss": loss, "scores": scores}


if __name__ == "__main__":
    key = jax.random.PRNGKey(0)
    kx, kw, kb, ky = jax.random.split(key, 4)

    batch, hidden, num_classes = 8, 32, 16
    x = jax.random.normal(kx, (batch, hidden), dtype=jnp.float32)
    # Deterministic parameter init (synthetic "pretrained" weights).
    w = jax.random.normal(kw, (hidden, num_classes), dtype=jnp.float32) * 0.02
    b = jax.random.normal(kb, (num_classes,), dtype=jnp.float32) * 0.02
    y = jax.random.randint(ky, (batch,), 0, num_classes, dtype=jnp.int32)

    out = module_forward(x, w, b, y)
    jax.block_until_ready(out["scores"])
    jax.block_until_ready(out["loss"])

    # Reference: same math, same bf16 matmul inputs (kernel uses bf16 MXU).
    ref_scores = jnp.dot(x.astype(jnp.bfloat16), w.astype(jnp.bfloat16),
                         preferred_element_type=jnp.float32) + b
    ref_lse = jax.nn.logsumexp(ref_scores, axis=-1)
    ref_loss = jnp.mean(ref_lse - ref_scores[jnp.arange(batch), y])

    assert out["scores"].shape == (batch, num_classes)
    assert jnp.allclose(out["scores"], ref_scores, atol=1e-3, rtol=1e-3)
    assert jnp.allclose(out["loss"], ref_loss, atol=1e-3, rtol=1e-3)

    # Sanity vs. full-f32 math (bf16 matmul inputs => looser tolerance).
    f32_scores = x @ w + b
    assert jnp.allclose(out["scores"], f32_scores, atol=3e-2, rtol=3e-2)

    print("KERNEL_OK")
</pallas_src>

<mosaic_0001>
module attributes {stable_mosaic.version = 11 : i64} {
  func.func @kernel(%arg0: i32, %arg1: memref<16x32xbf16, #tpu.memory_space<vmem>>, %arg2: memref<32x128xbf16, #tpu.memory_space<vmem>>, %arg3: memref<1x128xf32, #tpu.memory_space<vmem>>, %arg4: memref<16x1xi32, #tpu.memory_space<vmem>>, %arg5: memref<16x128xf32, #tpu.memory_space<vmem>>, %arg6: memref<16x1xf32, #tpu.memory_space<vmem>>) attributes {dimension_semantics = [#tpu.dimension_semantics<parallel>], iteration_bounds = array<i64: 1>, scalar_prefetch = 0 : i64, scratch_operands = 0 : i64, tpu.core_type = #tpu.core_type<tc>, window_params = [{transform_indices = @transform_0, window_bounds = array<i64: 16, 32>}, {pipeline_mode = #tpu.pipeline_mode<synchronous>, transform_indices = @transform_1, window_bounds = array<i64: 32, 128>}, {pipeline_mode = #tpu.pipeline_mode<synchronous>, transform_indices = @transform_2, window_bounds = array<i64: 1, 128>}, {transform_indices = @transform_3, window_bounds = array<i64: 16, 1>}, {transform_indices = @transform_4, window_bounds = array<i64: 16, 128>}, {transform_indices = @transform_5, window_bounds = array<i64: 16, 1>}]} {
    %c0 = arith.constant 0 : index
    %c0_0 = arith.constant 0 : index
    %0 = vector.load %arg1[%c0, %c0_0] : memref<16x32xbf16, #tpu.memory_space<vmem>>, vector<16x32xbf16>
    %c0_1 = arith.constant 0 : index
    %c0_2 = arith.constant 0 : index
    %1 = vector.load %arg2[%c0_1, %c0_2] : memref<32x128xbf16, #tpu.memory_space<vmem>>, vector<32x128xbf16>
    %cst = arith.constant dense<0.000000e+00> : vector<16x128xf32>
    %2 = tpu.matmul %0, %1, %cst {dimension_numbers = #tpu.dot_dimension_numbers<[1], [0], [0], [1], [0, 0, 1, 1], [], []>} : vector<16x32xbf16>, vector<32x128xbf16>, vector<16x128xf32> -> vector<16x128xf32>
    %c0_3 = arith.constant 0 : index
    %c0_4 = arith.constant 0 : index
    %3 = vector.load %arg3[%c0_3, %c0_4] : memref<1x128xf32, #tpu.memory_space<vmem>>, vector<1x128xf32>
    %4 = vector.broadcast %3 : vector<1x128xf32> to vector<16x128xf32>
    %5 = arith.addf %2, %4 : vector<16x128xf32>
    %c0_5 = arith.constant 0 : index
    %c0_6 = arith.constant 0 : index
    %6 = vector.load %arg5[%c0_5, %c0_6] : memref<16x128xf32, #tpu.memory_space<vmem>>, vector<16x128xf32>
    tpu.vector_store %arg5[%c0_5, %c0_6], %5 {strides = array<i32>} : memref<16x128xf32, #tpu.memory_space<vmem>>, vector<16x128xf32>,
    %cst_7 = arith.constant dense<0xFF800000> : vector<16xf32>
    %7 = vector.multi_reduction <maximumf>, %5, %cst_7 [1] : vector<16x128xf32> to vector<16xf32>
    %8 = vector.shape_cast %7 : vector<16xf32> to vector<16x1xf32>
    %9 = vector.broadcast %8 : vector<16x1xf32> to vector<16x128xf32>
    %10 = arith.subf %5, %9 : vector<16x128xf32>
    %11 = math.exp %10 : vector<16x128xf32>
    %cst_8 = arith.constant dense<0.000000e+00> : vector<16xf32>
    %12 = vector.multi_reduction <add>, %11, %cst_8 [1] : vector<16x128xf32> to vector<16xf32>
    %13 = vector.shape_cast %12 : vector<16xf32> to vector<16x1xf32>
    %14 = math.log %13 : vector<16x1xf32>
    %15 = arith.addf %8, %14 : vector<16x1xf32>
    %c0_9 = arith.constant 0 : index
    %c0_10 = arith.constant 0 : index
    %16 = vector.load %arg4[%c0_9, %c0_10] : memref<16x1xi32, #tpu.memory_space<vmem>>, vector<16x1xi32>
    %17 = tpu.iota {dimensions = array<i32: 1>} : vector<16x128xi32>
    %18 = vector.broadcast %16 : vector<16x1xi32> to vector<16x128xi32>
    %19 = arith.cmpi eq, %17, %18 : vector<16x128xi32>
    %cst_11 = arith.constant 0.000000e+00 : f32
    %20 = vector.broadcast %cst_11 : f32 to vector<16x128xf32>
    %21 = arith.select %19, %5, %20 : vector<16x128xi1>, vector<16x128xf32>
    %cst_12 = arith.constant dense<0.000000e+00> : vector<16xf32>
    %22 = vector.multi_reduction <add>, %21, %cst_12 [1] : vector<16x128xf32> to vector<16xf32>
    %23 = vector.shape_cast %22 : vector<16xf32> to vector<16x1xf32>
    %24 = arith.subf %15, %23 : vector<16x1xf32>
    %c16_i32 = arith.constant 16 : i32
    %25 = arith.muli %arg0, %c16_i32 : i32
    %26 = tpu.iota {dimensions = array<i32: 0>} : vector<16x1xi32>
    %27 = vector.broadcast %25 : i32 to vector<16x1xi32>
    %28 = arith.addi %27, %26 : vector<16x1xi32>
    %c8_i32 = arith.constant 8 : i32
    %29 = vector.broadcast %c8_i32 : i32 to vector<16x1xi32>
    %30 = arith.cmpi slt, %28, %29 : vector<16x1xi32>
    %cst_13 = arith.constant 0.000000e+00 : f32
    %31 = vector.broadcast %cst_13 : f32 to vector<16x1xf32>
    %32 = arith.select %30, %24, %31 : vector<16x1xi1>, vector<16x1xf32>
    %c0_14 = arith.constant 0 : index
    %c0_15 = arith.constant 0 : index
    %33 = vector.load %arg6[%c0_14, %c0_15] : memref<16x1xf32, #tpu.memory_space<vmem>>, vector<16x1xf32>
    tpu.vector_store %arg6[%c0_14, %c0_15], %32 {strides = array<i32>} : memref<16x1xf32, #tpu.memory_space<vmem>>, vector<16x1xf32>,
    return
  }
  func.func @transform_0(%arg0: i32) -> (i32, i32) {
    %c0_i32 = arith.constant 0 : i32
    %c0_i32_0 = arith.constant 0 : i32
    return %arg0, %c0_i32 : i32, i32
  }
  func.func @transform_1(%arg0: i32) -> (i32, i32) {
    %c0_i32 = arith.constant 0 : i32
    %c0_i32_0 = arith.constant 0 : i32
    %c0_i32_1 = arith.constant 0 : i32
    return %c0_i32, %c0_i32_0 : i32, i32
  }
  func.func @transform_2(%arg0: i32) -> (i32, i32) {
    %c0_i32 = arith.constant 0 : i32
    %c0_i32_0 = arith.constant 0 : i32
    %c0_i32_1 = arith.constant 0 : i32
    return %c0_i32, %c0_i32_0 : i32, i32
  }
  func.func @transform_3(%arg0: i32) -> (i32, i32) {
    %c0_i32 = arith.constant 0 : i32
    %c0_i32_0 = arith.constant 0 : i32
    return %arg0, %c0_i32 : i32, i32
  }
  func.func @transform_4(%arg0: i32) -> (i32, i32) {
    %c0_i32 = arith.constant 0 : i32
    %c0_i32_0 = arith.constant 0 : i32
    return %arg0, %c0_i32 : i32, i32
  }
  func.func @transform_5(%arg0: i32) -> (i32, i32) {
    %c0_i32 = arith.constant 0 : i32
    %c0_i32_0 = arith.constant 0 : i32
    return %arg0, %c0_i32 : i32, i32
  }
}

</mosaic_0001>

<llo_original>
// kernel: module_forward.1
$region0: #{module_forward.1}
  #allocation0 [shape = 'u32[]', space=smem, size = 0x4, offset = 0x4, fixed_abs, tag = 'smem constant byte address 0x4 - core index']
  #allocation1 [shape = 'u32[144,128]{1,0:T(1,128)}', space=vmem, size = 0x12000, scoped, tag = 'internal scratch']
  %s0 = inlined_call_operand.vmem [shape: bf16[16,32], index: 0, kind: input, shape index: {}]
  %s1 = inlined_call_operand.vmem [shape: bf16[32,128], index: 1, kind: input, shape index: {}]
  %s2 = inlined_call_operand.vmem [shape: f32[1,128], index: 2, kind: input, shape index: {}]
  %s3 = inlined_call_operand.vmem [shape: s32[16,1], index: 3, kind: input, shape index: {}]
  %s4 = inlined_call_operand.vmem [shape: f32[16,128], index: 4, kind: output, shape index: {0}]
  %s5 = inlined_call_operand.vmem [shape: f32[16,1], index: 5, kind: output, shape index: {1}]
  %6 = xla_tuple %s4, %s5
  %s7 = sld [smem:[#allocation0]]
  $region34: #{module_forward.1} parent=0
    _
  %s9 = ssub.s32 1, %s7
  %s10 = scalar_select 0, %s9, %s7
  // Predicated region
  $region2: #{module_forward.1} parent=0 // pred_check
    _
  $region3: #{module_forward.1} parent=0 // pred_check_branch
    %12 = sbr.rel (0) target = $region5
  $region4: #{module_forward.1} parent=0 // pred_region
    _
  $region5: #{module_forward.1} parent=0 // pred_fallthru
    _
  // Predicated region
  $region6: #{module_forward.1} parent=0 // pred_check
    _
  $region7: #{module_forward.1} parent=0 // pred_check_branch
    %14 = sbr.rel (0) target = $region9
  $region8: #{module_forward.1} parent=0 // pred_region
    _
  $region9: #{module_forward.1} parent=0 // pred_fallthru
    _
  // Predicated region
  $region10: #{module_forward.1} parent=0 // pred_check
    _
  $region11: #{module_forward.1} parent=0 // pred_check_branch
    %16 = sbr.rel (0) target = $region13
  $region12: #{module_forward.1} parent=0 // pred_region
    _
  $region13: #{module_forward.1} parent=0 // pred_fallthru
    _
  // Predicated region
  $region14: #{module_forward.1} parent=0 // pred_check
    _
  $region15: #{module_forward.1} parent=0 // pred_check_branch
    %18 = sbr.rel (0) target = $region17
  $region16: #{module_forward.1} parent=0 // pred_region
    _
  $region17: #{module_forward.1} parent=0 // pred_fallthru
    _
  %v20 = vld [vmem:[%s0] sm:$0xf]
  %v21 = vld [vmem:[%s0 + $0x4] sm:$0xf]
  %v22 = vld [vmem:[%s1] sm:$0xf]
  %v23 = vld [vmem:[%s1 + $0x4] sm:$0xf]
  %v24 = vld [vmem:[%s1 + $0x8] sm:$0xf]
  %v25 = vld [vmem:[%s1 + $0xc] sm:$0xf]
  %v26 = vld [vmem:[%s2] sm:$0x1]
  %v28 = vlaneseq
  %v29 = vshrl.u32 %v28, 7
  %v30 = vsub.s32 0, %v29
  %v31 = vrot.slane %v26, %v30
  %v35 = vunpack.c.l.b16 %v20
  %v36 = vunpack.c.l.b16 %v21
  %v37 = vpack.c.b16 %v36, %v35
  %v42 = vunpack.c.l.b16 %v22
  %v43 = vunpack.c.l.b16 %v23
  %v44 = vunpack.c.l.b16 %v24
  %v45 = vunpack.c.l.b16 %v25
  %v46 = vpack.c.b16 %v43, %v42
  %v47 = vpack.c.b16 %v45, %v44
  %vm50 = vcmask 261120
  %v52 = vsel %vm50, %v37, 0
  %54 = vmatprep.subr.bf16.mxu0 0
  %55 = vmatpush1.bf16.msra.mxu0 %v46
  %56 = vmatprep.subr.bf16.mxu0 0
  %57 = vmatpush1.bf16.msra.mxu0 %v47
  %58 = vmatprep.subr.bf16.mxu0 0
  %59 = vmatpush1.bf16.msra.mxu0 0
  %60 = vmatprep.subr.bf16.mxu0 0
  %61 = vmatpush1.bf16.msra.mxu0 0
  %62 = vmatprep.subr.bf16.mxu0 0
  %63 = vmatpush1.bf16.msra.mxu0 0
  %64 = vmatprep.subr.bf16.mxu0 0
  %65 = vmatpush1.bf16.msra.mxu0 0
  %66 = vmatprep.subr.bf16.mxu0 0
  %67 = vmatpush1.bf16.msra.mxu0 0
  %68 = vmatprep.subr.bf16.mxu0 0
  %69 = vmatpush1.bf16.msra.mxu0 0
  %70 = vmatprep.subr.bf16.mxu0 0
  %71 = vmatpush1.bf16.msra.mxu0 0
  %72 = vmatprep.subr.bf16.mxu0 0
  %73 = vmatpush1.bf16.msra.mxu0 0
  %74 = vmatprep.subr.bf16.mxu0 0
  %75 = vmatpush1.bf16.msra.mxu0 0
  %76 = vmatprep.subr.bf16.mxu0 0
  %77 = vmatpush1.bf16.msra.mxu0 0
  %78 = vmatprep.subr.bf16.mxu0 0
  %79 = vmatpush1.bf16.msra.mxu0 0
  %80 = vmatprep.subr.bf16.mxu0 0
  %81 = vmatpush1.bf16.msra.mxu0 0
  %82 = vmatprep.subr.bf16.mxu0 0
  %83 = vmatpush1.bf16.msra.mxu0 0
  %84 = vmatprep.subr.bf16.mxu0 0
  %85 = vmatpush1.bf16.msra.mxu0 0
  %86 = vmatprep.mubr.bf16.mxu0 0
  %87 = vmatmul.mubr.bf16.gmra.mrb[0].mxu0 %v52
  %v88 = vpop.f32.mrb[0].mxu0
  %v89 = vadd.f32 %v31, %v88
  %v90 = vpop.f32.mrb[0].mxu0
  %v91 = vpop.f32.mrb[0].mxu0
  %v92 = vadd.f32 %v31, %v91
  %v93 = vpop.f32.mrb[0].mxu0
  %94 = vdwg.mxu0
  %95 = vst [vmem:[%s4] sm:$0xff] %v89
  %96 = vst [vmem:[%s4 + $0x8] sm:$0xff] %v92
  %97 = vmax.xlane.f32.xlu0 %v89
  %v98 = vpop.xlane.xlu0 %97
  %99 = vmax.xlane.f32.xlu0 %v92
  %v100 = vpop.xlane.xlu0 %99
  %v101 = vsub.f32 %v89, %v98
  %v102 = vsub.f32 %v92, %v100
  %v103 = vmul.f32 %v101, 1.442695
  %v104 = vpow.pop %v103
  %v105 = vmul.f32 %v102, 1.442695
  %v106 = vpow.pop %v105
  %107 = vadd.xlane.f32.xlu0 %v104
  %v108 = vpop.xlane.xlu0 %107
  %109 = vadd.xlane.f32.xlu0 %v106
  %v110 = vpop.xlane.xlu0 %109
  %v111 = vlog2.pop %v108
  %v112 = vmul.f32 %v111, 0.6931472
  %v113 = vlog2.pop %v110
  %v114 = vmul.f32 %v113, 0.6931472
  %v115 = vadd.f32 %v98, %v112
  %v116 = vadd.f32 %v100, %v114
  %v117 = vld [vmem:[%s3] sm:$0xff]
  %v118 = vld [vmem:[%s3 + $0x8] sm:$0xff]
  %v119 = vlaneseq
  %v120 = vand.u32 %v119, 127
  %121 = vset.pattern.permute.xlu0 0
  %122 = vperm.xlu0 %121, %v117
  %v123 = vpop.permute.xlu0 %122
  %124 = vset.pattern.permute.xlu0 0
  %125 = vperm.xlu0 %124, %v118
  %v126 = vpop.permute.xlu0 %125
  %vm127 = vcmp.eq.s32.totalorder %v120, %v123
  %vm128 = vcmp.eq.s32.totalorder %v120, %v126
  %v129 = vsel %vm127, %v89, 0.0
  %v130 = vsel %vm128, %v92, 0.0
  %131 = vadd.xlane.f32.xlu0 %v129
  %v132 = vpop.xlane.xlu0 %131
  %133 = vadd.xlane.f32.xlu0 %v130
  %v134 = vpop.xlane.xlu0 %133
  %v135 = vsub.f32 %v115, %v132
  %v136 = vsub.f32 %v116, %v134
  %s137 = smul.u32 0, 16
  %v138 = vlaneseq
  %v139 = vshrl.u32 %v138, 7
  %v140 = vadd.s32 %v139, 8
  %v141 = vstv %s137
  %v142 = vadd.s32 %v141, %v139
  %v143 = vadd.s32 %v141, %v140
  %vm144 = vcmp.lt.s32.totalorder %v142, 8
  %vm145 = vcmp.lt.s32.totalorder %v143, 8
  %v146 = vsel %vm144, %v135, 0.0
  %v147 = vsel %vm145, %v136, 0.0
  %vm148 = vcmask 7168
  %149 = vst.msk [vmem:[%s5] sm:$0xff] %vm148, %v146
  %150 = vst.msk [vmem:[%s5 + $0x8] sm:$0xff] %vm148, %v147
  // Predicated region
  $region18: #{module_forward.1} parent=0 // pred_check
    _
  $region19: #{module_forward.1} parent=0 // pred_check_branch
    %152 = sbr.rel (0) target = $region21
  $region20: #{module_forward.1} parent=0 // pred_region
    _
  $region21: #{module_forward.1} parent=0 // pred_fallthru
    _
  // Predicated region
  $region22: #{module_forward.1} parent=0 // pred_check
    _
  $region23: #{module_forward.1} parent=0 // pred_check_branch
    %154 = sbr.rel (0) target = $region25
  $region24: #{module_forward.1} parent=0 // pred_region
    _
  $region25: #{module_forward.1} parent=0 // pred_fallthru
    _
  // Predicated region
  $region26: #{module_forward.1} parent=0 // pred_check
    _
  $region27: #{module_forward.1} parent=0 // pred_check_branch
    %156 = sbr.rel (0) target = $region29
  $region28: #{module_forward.1} parent=0 // pred_region
    _
  $region29: #{module_forward.1} parent=0 // pred_fallthru
    _
  // Predicated region
  $region30: #{module_forward.1} parent=0 // pred_check
    _
  $region31: #{module_forward.1} parent=0 // pred_check_branch
    %158 = sbr.rel (0) target = $region33
  $region32: #{module_forward.1} parent=0 // pred_region
    _
  $region33: #{module_forward.1} parent=0 // pred_fallthru
    _

</llo_original>
